<compile_context>
chip_gen: v7x
topology: tpu7x:2x2x1
jax: 0.10.0
libtpu: 0.0.40
codegen_flags: <defaults>
</compile_context>

<pallas_src>
import math

import jax
import jax.numpy as jnp
from jax import lax
from jax.experimental import pallas as pl
from jax.experimental.pallas import tpu as pltpu


_NUM_CORES = 2  # leading "parallel" axis for pass 1 (v7x has 2 TCs; no effect on v5e/v6e)


def _pick_bt(B, L, target_rows=2048, unroll_cap=8):
    """Batch elements per grid step: largest divisor of B with bt <= unroll_cap and
    bt*L <= max(target_rows, L) (collapses batch into the block when L is short)."""
    best = 1
    for bt in range(1, min(B, unroll_cap) + 1):
        if B % bt == 0 and bt * L <= max(target_rows, L):
            best = bt
    return best


def _vmem_limit_bytes(bt, L, D, C):
    """Tile-derived VMEM limit, clamped to [16, 48] MiB (leaves headroom on v7x)."""
    lane_c = ((C + 127) // 128) * 128          # C pads to a full 128-lane tile in VMEM
    x_blk = bt * (L + 2) * lane_c * 4
    out_blk = bt * L * D * 4
    pe_blk = L * D * 4
    est = 2 * (x_blk + out_blk + pe_blk) + (2 << 20)
    return int(min(max(2 * est, 16 << 20), 48 << 20))


# ---------------- pass 1: centered per-channel sum-of-squares of the conv output ------

def _make_stats_kernel(bt, L, steps_per_core, n_blocks):
    def kernel(xpad_ref, w_ref, mean_ref, stat_ref):
        core = pl.program_id(0)
        step = pl.program_id(1)

        @pl.when(step == 0)
        def _init():
            stat_ref[...] = jnp.zeros_like(stat_ref)

        @pl.when(core * steps_per_core + step < n_blocks)   # tail guard (index map clamps)
        def _accumulate():
            mean = mean_ref[...]                              # (1, D) exact conv-output mean
            w0, w1, w2 = w_ref[0], w_ref[1], w_ref[2]         # (C, D) taps
            sq = None
            for i in range(bt):                               # bt is small and static
                xp = xpad_ref[i]                              # (L+2, C)
                conv = (jnp.dot(xp[0:L], w0, preferred_element_type=jnp.float32)
                        + jnp.dot(xp[1:L + 1], w1, preferred_element_type=jnp.float32)
                        + jnp.dot(xp[2:L + 2], w2, preferred_element_type=jnp.float32))
                c = conv - mean                               # centered -> no cancellation
                sq = c * c if sq is None else sq + c * c      # (L, D)
            # Row reduction on the (idle) MXU instead of a cross-sublane XLU sum.
            ones_row = jnp.ones((1, L), jnp.float32)
            stat_ref[0] += jnp.dot(ones_row, sq, preferred_element_type=jnp.float32)

    return kernel


# ---------------- pass 2: conv + fused BN affine + resident positional embedding ------

def _make_embed_kernel(bt, L):
    def kernel(xpad_ref, w_ref, scale_ref, shift_ref, pe_ref, o_ref):
        scale = scale_ref[...]                                # (1, D)  resident
        shift = shift_ref[...]                                # (1, D)  resident
        pe = pe_ref[...]                                      # (L, D)  resident (read once)
        w0, w1, w2 = w_ref[0], w_ref[1], w_ref[2]
        for i in range(bt):
            xp = xpad_ref[i]                                  # (L+2, C)
            conv = (jnp.dot(xp[0:L], w0, preferred_element_type=jnp.float32)
                    + jnp.dot(xp[1:L + 1], w1, preferred_element_type=jnp.float32)
                    + jnp.dot(xp[2:L + 2], w2, preferred_element_type=jnp.float32))
            o_ref[i] = (conv * scale + shift + pe).astype(o_ref.dtype)

    return kernel


def data_embedding2_forward(x, x_mark, params, *, out_dtype=jnp.float32, bn_training=True):
    """x: (B, L, c_in-5) float32.  x_mark is unused when sta_in == 0 (matches PyTorch).

    Set out_dtype=jnp.bfloat16 to halve the (dominant) output-write HBM traffic if the
    downstream consumer tolerates bf16.
    """
    del x_mark
    if not bn_training:
        # The Conv1d bias is dropped because training-mode BN centering cancels it
        # exactly; the eval-mode (running stats) path would need the bias restored.
        raise NotImplementedError("eval-mode BatchNorm path not implemented")

    B, L, C = x.shape
    w = params['conv_w']                                      # (3, C, D), tap-major
    D = w.shape[2]
    R = B * L

    # Single tiny materialization of the padded input (~C/D of the output bytes).
    x_pad = jnp.pad(x, ((0, 0), (1, 1), (0, 0)))              # (B, L+2, C)

    # Exact per-channel mean of the (bias-free) conv output, from per-tap column sums.
    s_all = jnp.sum(x, axis=(0, 1))
    s_first = jnp.sum(x[:, 0, :], axis=0)
    s_last = jnp.sum(x[:, -1, :], axis=0)
    tap_sums = jnp.stack([s_all - s_last, s_all, s_all - s_first], axis=0)    # (3, C)
    mean = (jnp.einsum('tc,tcd->d', tap_sums, w) / jnp.float32(R)).reshape(1, D)

    bt = _pick_bt(B, L)
    vmem_limit = _vmem_limit_bytes(bt, L, D, C)
    n_blocks = B // bt
    steps_per_core = -(-n_blocks // _NUM_CORES)               # cdiv

    # ---- pass 1: centered sum of squares, split across TensorCores -------------------
    stats = pl.pallas_call(
        _make_stats_kernel(bt, L, steps_per_core, n_blocks),
        out_shape=jax.ShapeDtypeStruct((_NUM_CORES, 1, D), jnp.float32),
        grid=(_NUM_CORES, steps_per_core),
        in_specs=[
            pl.BlockSpec((bt, L + 2, C),
                         lambda c, s, S=steps_per_core, nb=n_blocks:
                             (jnp.minimum(c * S + s, nb - 1), 0, 0)),
            pl.BlockSpec((3, C, D), lambda c, s: (0, 0, 0)),   # resident
            pl.BlockSpec((1, D), lambda c, s: (0, 0)),         # resident
        ],
        out_specs=pl.BlockSpec((1, 1, D), lambda c, s: (c, 0, 0)),
        compiler_params=pltpu.CompilerParams(
            dimension_semantics=("parallel", "arbitrary"),
            vmem_limit_bytes=vmem_limit),
    )(x_pad, w, mean)
    sumsq = jnp.sum(stats[:, 0, :], axis=0)                   # (D,)

    # ---- BatchNorm1d (training mode) folded into one scale / shift vector ------------
    var = sumsq / jnp.float32(R)                              # biased batch variance
    inv = lax.rsqrt(var + 1e-5)
    scale = (params['bn_gamma'].reshape(D) * inv).reshape(1, D)
    bn_shift = (params['bn_beta'].reshape(D)
                - mean.reshape(D) * scale.reshape(D)).reshape(1, D)
    pe = params['pe'][:L]                                     # (L, D), resident in pass 2

    # ---- pass 2: conv recompute + fused normalize + positional embedding -------------
    out = pl.pallas_call(
        _make_embed_kernel(bt, L),
        out_shape=jax.ShapeDtypeStruct((B, L, D), out_dtype),
        grid=(B // bt,),
        in_specs=[
            pl.BlockSpec((bt, L + 2, C), lambda b: (b, 0, 0)),
            pl.BlockSpec((3, C, D), lambda b: (0, 0, 0)),      # resident
            pl.BlockSpec((1, D), lambda b: (0, 0)),            # resident
            pl.BlockSpec((1, D), lambda b: (0, 0)),            # resident
            pl.BlockSpec((L, D), lambda b: (0, 0)),            # resident: PE read from HBM once
        ],
        out_specs=pl.BlockSpec((bt, L, D), lambda b: (b, 0, 0)),
        compiler_params=pltpu.CompilerParams(
            dimension_semantics=("parallel",),
            vmem_limit_bytes=vmem_limit),
    )(x_pad, w, scale, bn_shift, pe)

    # TODO(synk): nn.Dropout(p=0.1) is stochastic in training mode; treated as identity
    # (inference semantics) here.
    # TODO(synk): extremely long sequences (L on the order of 12k+) would need an
    # L-tiled halo-DMA variant to keep the full-L blocks within VMEM.
    return out


def make_positional_embedding(L, D):
    assert D % 2 == 0, "d_model must be even for the sin/cos interleave"
    position = jnp.arange(L, dtype=jnp.float32)[:, None]
    div_term = jnp.exp(jnp.arange(0, D, 2, dtype=jnp.float32) * -(math.log(10000.0) / D))
    sin = jnp.sin(position * div_term)                        # -> pe[:, 0::2]
    cos = jnp.cos(position * div_term)                        # -> pe[:, 1::2]
    return jnp.stack([sin, cos], axis=-1).reshape(L, D)


def init_params(key, c_in, d_model, L):
    C = c_in - 5
    k1, k2 = jax.random.split(key)
    fan_in = C * 3
    gain = math.sqrt(2.0 / (1.0 + 0.01 ** 2))                 # kaiming_normal, leaky_relu, fan_in
    conv_w = (gain / math.sqrt(fan_in)) * jax.random.normal(k1, (3, C, d_model), jnp.float32)
    bound = 1.0 / math.sqrt(fan_in)
    # conv_b is dead math under training-mode BatchNorm (centering cancels it); kept for
    # parameter parity with the PyTorch module but not passed to the kernels.
    conv_b = jax.random.uniform(k2, (1, d_model), jnp.float32, -bound, bound)
    return {
        'conv_w': conv_w,
        'conv_b': conv_b,
        'bn_gamma': jnp.ones((1, d_model), jnp.float32),      # BatchNorm1d default init
        'bn_beta': jnp.zeros((1, d_model), jnp.float32),
        'pe': make_positional_embedding(L, d_model),
    }


def _reference_forward(x, params):
    """Pure-JAX reference of the same forward (f32, bias dropped because BN cancels it)."""
    B, L, C = x.shape
    w = params['conv_w']                                      # (3, C, D)
    D = w.shape[2]
    x_pad = jnp.pad(x, ((0, 0), (1, 1), (0, 0)))
    conv = (jnp.einsum('blc,cd->bld', x_pad[:, 0:L], w[0])
            + jnp.einsum('blc,cd->bld', x_pad[:, 1:L + 1], w[1])
            + jnp.einsum('blc,cd->bld', x_pad[:, 2:L + 2], w[2]))
    mean = conv.mean(axis=(0, 1), keepdims=True)
    var = ((conv - mean) ** 2).mean(axis=(0, 1), keepdims=True)
    y = (conv - mean) * lax.rsqrt(var + 1e-5)
    y = y * params['bn_gamma'].reshape(1, 1, D) + params['bn_beta'].reshape(1, 1, D)
    return y + params['pe'][:L].reshape(1, L, D)


if __name__ == "__main__":
    key = jax.random.PRNGKey(0)

    def run_case(case_key, B, L, c_in, d_model):
        kx, km, kp = jax.random.split(case_key, 3)
        x = jax.random.normal(kx, (B, L, c_in - 5), jnp.float32)
        x_mark = jax.random.normal(km, (B, L, 3), jnp.float32)   # unused (sta_in == 0)
        params = init_params(kp, c_in, d_model, L)
        out = data_embedding2_forward(x, x_mark, params)
        jax.block_until_ready(out)
        assert out.shape == (B, L, d_model) and out.dtype == jnp.float32
        ref = _reference_forward(x, params)
        err = float(jnp.max(jnp.abs(out - ref)))
        assert err < 2e-4, err

    k1, k2 = jax.random.split(key)
    run_case(k1, B=2, L=8, c_in=9, d_model=128)       # tiny, single-step grid
    run_case(k2, B=6, L=512, c_in=9, d_model=128)     # multi-step grid + core-split pass 1
    print("KERNEL_OK")
</pallas_src>

<mosaic_0001>
module attributes {stable_mosaic.version = 11 : i64} {
  func.func @kernel(%arg0: i32, %arg1: i32, %arg2: memref<2x10x4xf32, #tpu.memory_space<vmem>>, %arg3: memref<3x4x128xf32, #tpu.memory_space<vmem>>, %arg4: memref<1x128xf32, #tpu.memory_space<vmem>>, %arg5: memref<1x1x128xf32, #tpu.memory_space<vmem>>) attributes {dimension_semantics = [#tpu.dimension_semantics<parallel>, #tpu.dimension_semantics<arbitrary>], iteration_bounds = array<i64: 2, 1>, scalar_prefetch = 0 : i64, scratch_operands = 0 : i64, tpu.core_type = #tpu.core_type<tc>, window_params = [{transform_indices = @transform_0, window_bounds = array<i64: 2, 10, 4>}, {pipeline_mode = #tpu.pipeline_mode<synchronous>, transform_indices = @transform_1, window_bounds = array<i64: 3, 4, 128>}, {pipeline_mode = #tpu.pipeline_mode<synchronous>, transform_indices = @transform_2, window_bounds = array<i64: 1, 128>}, {transform_indices = @transform_3, window_bounds = array<i64: 1, 1, 128>}]} {
    %c0_i32 = arith.constant 0 : i32
    %0 = arith.cmpi eq, %arg1, %c0_i32 : i32
    %1 = arith.extui %0 : i1 to i32
    %c0_i32_0 = arith.constant 0 : i32
    %2 = arith.cmpi ne, %1, %c0_i32_0 : i32
    scf.if %2 {
      %cst = arith.constant 0.000000e+00 : f32
      %8 = vector.broadcast %cst : f32 to vector<1x1x128xf32>
      %c0 = arith.constant 0 : index
      %c0_3 = arith.constant 0 : index
      %c0_4 = arith.constant 0 : index
      %9 = vector.load %arg5[%c0, %c0_3, %c0_4] : memref<1x1x128xf32, #tpu.memory_space<vmem>>, vector<1x1x128xf32>
      tpu.vector_store %arg5[%c0, %c0_3, %c0_4], %8 {strides = array<i32>} : memref<1x1x128xf32, #tpu.memory_space<vmem>>, vector<1x1x128xf32>,
    } else {
    }
    %c1_i32 = arith.constant 1 : i32
    %3 = arith.muli %arg0, %c1_i32 : i32
    %4 = arith.addi %3, %arg1 : i32
    %c1_i32_1 = arith.constant 1 : i32
    %5 = arith.cmpi slt, %4, %c1_i32_1 : i32
    %6 = arith.extui %5 : i1 to i32
    %c0_i32_2 = arith.constant 0 : i32
    %7 = arith.cmpi ne, %6, %c0_i32_2 : i32
    scf.if %7 {
      %c0 = arith.constant 0 : index
      %c0_3 = arith.constant 0 : index
      %8 = vector.load %arg4[%c0, %c0_3] : memref<1x128xf32, #tpu.memory_space<vmem>>, vector<1x128xf32>
      %c0_4 = arith.constant 0 : index
      %c0_5 = arith.constant 0 : index
      %c0_6 = arith.constant 0 : index
      %9 = vector.load %arg3[%c0_4, %c0_5, %c0_6] : memref<3x4x128xf32, #tpu.memory_space<vmem>>, vector<1x4x128xf32>
      %10 = vector.shape_cast %9 : vector<1x4x128xf32> to vector<4x128xf32>
      %c1 = arith.constant 1 : index
      %c0_7 = arith.constant 0 : index
      %c0_8 = arith.constant 0 : index
      %11 = vector.load %arg3[%c1, %c0_7, %c0_8] : memref<3x4x128xf32, #tpu.memory_space<vmem>>, vector<1x4x128xf32>
      %12 = vector.shape_cast %11 : vector<1x4x128xf32> to vector<4x128xf32>
      %c2 = arith.constant 2 : index
      %c0_9 = arith.constant 0 : index
      %c0_10 = arith.constant 0 : index
      %13 = vector.load %arg3[%c2, %c0_9, %c0_10] : memref<3x4x128xf32, #tpu.memory_space<vmem>>, vector<1x4x128xf32>
      %14 = vector.shape_cast %13 : vector<1x4x128xf32> to vector<4x128xf32>
      %c0_11 = arith.constant 0 : index
      %c0_12 = arith.constant 0 : index
      %c0_13 = arith.constant 0 : index
      %15 = vector.load %arg2[%c0_11, %c0_12, %c0_13] : memref<2x10x4xf32, #tpu.memory_space<vmem>>, vector<1x10x4xf32>
      %16 = vector.shape_cast %15 : vector<1x10x4xf32> to vector<10x4xf32>
      %17 = vector.extract_strided_slice %16 {offsets = [0, 0], sizes = [8, 4], strides = [1, 1]} : vector<10x4xf32> to vector<8x4xf32>
      %cst = arith.constant dense<0.000000e+00> : vector<8x128xf32>
      %18 = tpu.matmul %17, %10, %cst {dimension_numbers = #tpu.dot_dimension_numbers<[1], [0], [0], [1], [0, 0, 1, 1], [], []>} : vector<8x4xf32>, vector<4x128xf32>, vector<8x128xf32> -> vector<8x128xf32>
      %19 = vector.extract_strided_slice %16 {offsets = [1, 0], sizes = [8, 4], strides = [1, 1]} : vector<10x4xf32> to vector<8x4xf32>
      %cst_14 = arith.constant dense<0.000000e+00> : vector<8x128xf32>
      %20 = tpu.matmul %19, %12, %cst_14 {dimension_numbers = #tpu.dot_dimension_numbers<[1], [0], [0], [1], [0, 0, 1, 1], [], []>} : vector<8x4xf32>, vector<4x128xf32>, vector<8x128xf32> -> vector<8x128xf32>
      %21 = arith.addf %18, %20 : vector<8x128xf32>
      %22 = vector.extract_strided_slice %16 {offsets = [2, 0], sizes = [8, 4], strides = [1, 1]} : vector<10x4xf32> to vector<8x4xf32>
      %cst_15 = arith.constant dense<0.000000e+00> : vector<8x128xf32>
      %23 = tpu.matmul %22, %14, %cst_15 {dimension_numbers = #tpu.dot_dimension_numbers<[1], [0], [0], [1], [0, 0, 1, 1], [], []>} : vector<8x4xf32>, vector<4x128xf32>, vector<8x128xf32> -> vector<8x128xf32>
      %24 = arith.addf %21, %23 : vector<8x128xf32>
      %25 = vector.broadcast %8 : vector<1x128xf32> to vector<8x128xf32>
      %26 = arith.subf %24, %25 : vector<8x128xf32>
      %27 = arith.mulf %26, %26 : vector<8x128xf32>
      %c1_16 = arith.constant 1 : index
      %c0_17 = arith.constant 0 : index
      %c0_18 = arith.constant 0 : index
      %28 = vector.load %arg2[%c1_16, %c0_17, %c0_18] : memref<2x10x4xf32, #tpu.memory_space<vmem>>, vector<1x10x4xf32>
      %29 = vector.shape_cast %28 : vector<1x10x4xf32> to vector<10x4xf32>
      %30 = vector.extract_strided_slice %29 {offsets = [0, 0], sizes = [8, 4], strides = [1, 1]} : vector<10x4xf32> to vector<8x4xf32>
      %cst_19 = arith.constant dense<0.000000e+00> : vector<8x128xf32>
      %31 = tpu.matmul %30, %10, %cst_19 {dimension_numbers = #tpu.dot_dimension_numbers<[1], [0], [0], [1], [0, 0, 1, 1], [], []>} : vector<8x4xf32>, vector<4x128xf32>, vector<8x128xf32> -> vector<8x128xf32>
      %32 = vector.extract_strided_slice %29 {offsets = [1, 0], sizes = [8, 4], strides = [1, 1]} : vector<10x4xf32> to vector<8x4xf32>
      %cst_20 = arith.constant dense<0.000000e+00> : vector<8x128xf32>
      %33 = tpu.matmul %32, %12, %cst_20 {dimension_numbers = #tpu.dot_dimension_numbers<[1], [0], [0], [1], [0, 0, 1, 1], [], []>} : vector<8x4xf32>, vector<4x128xf32>, vector<8x128xf32> -> vector<8x128xf32>
      %34 = arith.addf %31, %33 : vector<8x128xf32>
      %35 = vector.extract_strided_slice %29 {offsets = [2, 0], sizes = [8, 4], strides = [1, 1]} : vector<10x4xf32> to vector<8x4xf32>
      %cst_21 = arith.constant dense<0.000000e+00> : vector<8x128xf32>
      %36 = tpu.matmul %35, %14, %cst_21 {dimension_numbers = #tpu.dot_dimension_numbers<[1], [0], [0], [1], [0, 0, 1, 1], [], []>} : vector<8x4xf32>, vector<4x128xf32>, vector<8x128xf32> -> vector<8x128xf32>
      %37 = arith.addf %34, %36 : vector<8x128xf32>
      %38 = vector.broadcast %8 : vector<1x128xf32> to vector<8x128xf32>
      %39 = arith.subf %37, %38 : vector<8x128xf32>
      %40 = arith.mulf %39, %39 : vector<8x128xf32>
      %41 = arith.addf %27, %40 : vector<8x128xf32>
      %cst_22 = arith.constant 1.000000e+00 : f32
      %42 = vector.broadcast %cst_22 : f32 to vector<1x8xf32>
      %c0_23 = arith.constant 0 : index
      %c0_24 = arith.constant 0 : index
      %c0_25 = arith.constant 0 : index
      %43 = vector.load %arg5[%c0_23, %c0_24, %c0_25] : memref<1x1x128xf32, #tpu.memory_space<vmem>>, vector<1x1x128xf32>
      %44 = vector.shape_cast %43 : vector<1x1x128xf32> to vector<1x128xf32>
      %cst_26 = arith.constant dense<0.000000e+00> : vector<1x128xf32>
      %45 = tpu.matmul %42, %41, %cst_26 {dimension_numbers = #tpu.dot_dimension_numbers<[1], [0], [0], [1], [0, 0, 1, 1], [], []>} : vector<1x8xf32>, vector<8x128xf32>, vector<1x128xf32> -> vector<1x128xf32>
      %46 = arith.addf %44, %45 : vector<1x128xf32>
      %c0_27 = arith.constant 0 : index
      %c0_28 = arith.constant 0 : index
      %c0_29 = arith.constant 0 : index
      %47 = vector.load %arg5[%c0_27, %c0_28, %c0_29] : memref<1x1x128xf32, #tpu.memory_space<vmem>>, vector<1x1x128xf32>
      %48 = vector.shape_cast %47 : vector<1x1x128xf32> to vector<1x128xf32>
      %49 = vector.shape_cast %46 : vector<1x128xf32> to vector<1x1x128xf32>
      tpu.vector_store %arg5[%c0_27, %c0_28, %c0_29], %49 {strides = array<i32>} : memref<1x1x128xf32, #tpu.memory_space<vmem>>, vector<1x1x128xf32>,
    } else {
    }
    return
  }
  func.func @transform_0(%arg0: i32, %arg1: i32) -> (i32, i32, i32) {
    %c1_i32 = arith.constant 1 : i32
    %0 = arith.muli %arg0, %c1_i32 : i32
    %1 = arith.addi %0, %arg1 : i32
    %c0_i32 = arith.constant 0 : i32
    %2 = arith.minsi %1, %c0_i32 : i32
    %c0_i32_0 = arith.constant 0 : i32
    %c0_i32_1 = arith.constant 0 : i32
    %c0_i32_2 = arith.constant 0 : i32
    return %2, %c0_i32_0, %c0_i32_1 : i32, i32, i32
  }
  func.func @transform_1(%arg0: i32, %arg1: i32) -> (i32, i32, i32) {
    %c0_i32 = arith.constant 0 : i32
    %c0_i32_0 = arith.constant 0 : i32
    %c0_i32_1 = arith.constant 0 : i32
    %c0_i32_2 = arith.constant 0 : i32
    return %c0_i32, %c0_i32_0, %c0_i32_1 : i32, i32, i32
  }
  func.func @transform_2(%arg0: i32, %arg1: i32) -> (i32, i32) {
    %c0_i32 = arith.constant 0 : i32
    %c0_i32_0 = arith.constant 0 : i32
    %c0_i32_1 = arith.constant 0 : i32
    return %c0_i32, %c0_i32_0 : i32, i32
  }
  func.func @transform_3(%arg0: i32, %arg1: i32) -> (i32, i32, i32) {
    %c0_i32 = arith.constant 0 : i32
    %c0_i32_0 = arith.constant 0 : i32
    %c0_i32_1 = arith.constant 0 : i32
    return %arg0, %c0_i32, %c0_i32_0 : i32, i32, i32
  }
}

</mosaic_0001>

<llo_original>
// kernel: tpu_custom_call.1
$region0: #{tpu_custom_call.1}
  #allocation0 [shape = 'u32[]', space=smem, size = 0x4, offset = 0x4, fixed_abs, tag = 'smem constant byte address 0x4 - core index']
  #allocation1 [shape = 'u32[144,128]{1,0:T(1,128)}', space=vmem, size = 0x12000, scoped, tag = 'internal scratch']
  %s0 = inlined_call_operand.vmem [shape: f32[2,10,4], index: 0, kind: input, shape index: {}]
  %s1 = inlined_call_operand.vmem [shape: f32[3,4,128], index: 1, kind: input, shape index: {}]
  %s2 = inlined_call_operand.vmem [shape: f32[1,128], index: 2, kind: input, shape index: {}]
  %s3 = inlined_call_operand.hbm [shape: f32[2,1,128], index: 3, kind: output, shape index: {}]
  %s4 = sld [smem:[#allocation0]]
  $region53: #{tpu_custom_call.1} parent=0
    _
  %s6 = ssub.s32 1, %s4
  %s7 = scalar_select 0, %s6, %s4
  $region1: #{tpu_custom_call.1} parent=0
    #allocation2 [shape = 'u8[1024]{0}', space=vmem, size = 0x400, scoped, tag = 'output window, operand 0']
    #allocation3 [shape = 's32[2]{0}', space=sflag, size = 0x8, scoped, tag = 'scoped memory for tpu_custom_call.1']
    %8 = vsyncpa [#allocation3], 0
    %s9 = scalar_lea.sflag [#allocation3], 1
    %10 = vsyncpa %s9, 0
    loop: start=0, step=1, limit=4
    $region2: #{tpu_custom_call.1} parent=1 // loop_pre_header
      _
    $region3: #{tpu_custom_call.1} parent=1 // loop_header
      %s12 = sphi 0, %s16
      %p13 = scmp.ge.s32.totalorder %s12, 4
      %s19 = sphi 0, %s31
      %s20 = sphi 0, %s27
      %s21 = sphi 0, %s19
      %s22 = sphi 0, %s20
      %s23 = sphi 0, %s21
      %s24 = sphi 0, %s22
      %s40 = sphi 0, %s42
      %s43 = sphi 0, %s40
      %s44 = sphi 0, %s43
      %s60 = sphi 0, %s44
      %s64 = sphi 0, %s64
      %s66 = sphi 0, %s64
      %s67 = sphi 0, %s66
      %s81 = sphi 0, %s67
      %s85 = sphi 0, %s85
      %s87 = sphi 0, %s85
      %s88 = sphi 0, %s87
      %s102 = sphi 0, %s88
      %s108 = sphi 0, %s110
      %s111 = sphi 0, %s108
      %s112 = sphi 0, %s111
      %s128 = sphi 0, %s112
    $region4: #{tpu_custom_call.1} parent=1 // loop_header_branch
      %15 = sbr.rel (%p13) target = $region8
    $region5: #{tpu_custom_call.1} parent=1 // loop_body
      %s17 = ssub.s32 %s12, 1
      %s18 = ssub.s32 %s12, 2
      %s25 = sadd.s32 1, %s20
      %p26 = scmp.ge.s32.totalorder %s25, 1
      %s27 = scalar_select %p26, 0, %s25
      %s28 = sadd.s32 1, %s19
      %s29 = scalar_select %p26, %s28, %s19
      %p30 = scmp.ge.s32.totalorder %s29, 2
      %s31 = scalar_select %p30, 0, %s29
      %s32 = sadd.s32 %s19, %s20
      %p33 = scmp.lt.s32.totalorder %s32, 0
      %s34 = scalar_select %p33, %s32, 0
      %s35 = sadd.s32 %s31, %s27
      %p36 = scmp.lt.s32.totalorder %s35, 0
      %s37 = scalar_select %p36, %s35, 0
      %s38 = ssub.s32 %s34, %s37
      %p39 = scmp.eq.s32.totalorder %s38, 0
      %s41 = sadd.s32 %s40, 1
      %s42 = scalar_select %p39, %s40, %s41
      %p45 = pneg %p39
      %p46 = scmp.eq.s32.totalorder %s12, 1
      %p47 = por %p45, %p46
      %p48 = scmp.ne.s32.totalorder %s40, %s43
      %p49 = scmp.eq.s32.totalorder %s12, 0
      %p50 = por %p48, %p49
      %p51 = scmp.ne.s32.totalorder %s40, %s43
      %p52 = scmp.eq.s32.totalorder %s17, 1
      %p53 = por %p51, %p52
      %p54 = scmp.ne.s32.totalorder %s43, %s44
      %p55 = scmp.eq.s32.totalorder %s17, 0
      %p56 = por %p54, %p55
      %p57 = scmp.ne.s32.totalorder %s43, %s44
      %p58 = scmp.eq.s32.totalorder %s18, 1
      %p59 = por %p57, %p58
      %p61 = scmp.ne.s32.totalorder %s44, %s60
      %p62 = scmp.eq.s32.totalorder %s18, 0
      %p63 = por %p61, %p62
      %s65 = sadd.s32 %s64, 1
      %p68 = scmp.eq.s32.totalorder %s12, 1
      %p69 = scmp.ne.s32.totalorder %s64, %s66
      %p70 = scmp.eq.s32.totalorder %s12, 0
      %p71 = por %p69, %p70
      %p72 = scmp.ne.s32.totalorder %s64, %s66
      %p73 = scmp.eq.s32.totalorder %s17, 1
      %p74 = por %p72, %p73
      %p75 = scmp.ne.s32.totalorder %s66, %s67
      %p76 = scmp.eq.s32.totalorder %s17, 0
      %p77 = por %p75, %p76
      %p78 = scmp.ne.s32.totalorder %s66, %s67
      %p79 = scmp.eq.s32.totalorder %s18, 1
      %p80 = por %p78, %p79
      %p82 = scmp.ne.s32.totalorder %s67, %s81
      %p83 = scmp.eq.s32.totalorder %s18, 0
      %p84 = por %p82, %p83
      %s86 = sadd.s32 %s85, 1
      %p89 = scmp.eq.s32.totalorder %s12, 1
      %p90 = scmp.ne.s32.totalorder %s85, %s87
      %p91 = scmp.eq.s32.totalorder %s12, 0
      %p92 = por %p90, %p91
      %p93 = scmp.ne.s32.totalorder %s85, %s87
      %p94 = scmp.eq.s32.totalorder %s17, 1
      %p95 = por %p93, %p94
      %p96 = scmp.ne.s32.totalorder %s87, %s88
      %p97 = scmp.eq.s32.totalorder %s17, 0
      %p98 = por %p96, %p97
      %p99 = scmp.ne.s32.totalorder %s87, %s88
      %p100 = scmp.eq.s32.totalorder %s18, 1
      %p101 = por %p99, %p100
      %p103 = scmp.ne.s32.totalorder %s88, %s102
      %p104 = scmp.eq.s32.totalorder %s18, 0
      %p105 = por %p103, %p104
      %s106 = ssub.s32 %s19, %s31
      %p107 = scmp.eq.s32.totalorder %s106, 0
      %s109 = sadd.s32 %s108, 1
      %s110 = scalar_select %p107, %s108, %s109
      %p113 = pneg %p107
      %p114 = scmp.eq.s32.totalorder %s12, 1
      %p115 = por %p113, %p114
      %p116 = scmp.ne.s32.totalorder %s108, %s111
      %p117 = scmp.eq.s32.totalorder %s12, 0
      %p118 = por %p116, %p117
      %p119 = scmp.ne.s32.totalorder %s108, %s111
      %p120 = scmp.eq.s32.totalorder %s17, 1
      %p121 = por %p119, %p120
      %p122 = scmp.ne.s32.totalorder %s111, %s112
      %p123 = scmp.eq.s32.totalorder %s17, 0
      %p124 = por %p122, %p123
      %p125 = scmp.ne.s32.totalorder %s111, %s112
      %p126 = scmp.eq.s32.totalorder %s18, 1
      %p127 = por %p125, %p126
      %p129 = scmp.ne.s32.totalorder %s112, %s128
      %p130 = scmp.eq.s32.totalorder %s18, 0
      %p131 = por %p129, %p130
      %p132 = scmp.le.s32.totalorder 1, %s12
      %p133 = scmp.lt.s32.totalorder %s12, 3
      %p134 = pnand %p132, %p133
      %p135 = pneg %p134
      // Predicated region
      $region9: #{tpu_custom_call.1} parent=5 // pred_check
        _
      $region10: #{tpu_custom_call.1} parent=5 // pred_check_branch
        %137 = sbr.rel (%p134) target = $region12
      $region11: #{tpu_custom_call.1} parent=5 // pred_region
        %s138 = ssub.s32 %s12, 1
        // Predicated region
        $region13: #{tpu_custom_call.1} parent=11 // pred_check
          %p139 = pneg %p77
        $region14: #{tpu_custom_call.1} parent=11 // pred_check_branch
          %141 = sbr.rel (%p139) target = $region16
        $region15: #{tpu_custom_call.1} parent=11 // pred_region
          _
        $region16: #{tpu_custom_call.1} parent=11 // pred_fallthru
          _
        // Predicated region
        $region17: #{tpu_custom_call.1} parent=11 // pred_check
          %p142 = pneg %p98
        $region18: #{tpu_custom_call.1} parent=11 // pred_check_branch
          %144 = sbr.rel (%p142) target = $region20
        $region19: #{tpu_custom_call.1} parent=11 // pred_region
          _
        $region20: #{tpu_custom_call.1} parent=11 // pred_fallthru
          _
      $region12: #{tpu_custom_call.1} parent=5 // pred_fallthru
        _
      %p145 = scmp.lt.s32.totalorder %s12, 2
      // Predicated region
      $region21: #{tpu_custom_call.1} parent=5 // pred_check
        %p146 = pneg %p145
      $region22: #{tpu_custom_call.1} parent=5 // pred_check_branch
        %148 = sbr.rel (%p146) target = $region24
      $region23: #{tpu_custom_call.1} parent=5 // pred_region
        // Predicated region
        $region25: #{tpu_custom_call.1} parent=23 // pred_check
          %p149 = pneg %p50
        $region26: #{tpu_custom_call.1} parent=23 // pred_check_branch
          %151 = sbr.rel (%p149) target = $region28
        $region27: #{tpu_custom_call.1} parent=23 // pred_region
          %s152 = sadd.s32 %s19, %s20
          %p153 = scmp.lt.s32.totalorder %s152, 0
          %s154 = scalar_select %p153, %s152, 0
          %s155 = smul.u32 2, %s154
          %p156 = scmp.lt.s32.totalorder %s155, 1
          %s157 = scalar_select %p156, %s155, 1
          %s158 = smul.addr %s157, 2
          %s159 = smul.addr %s158, 8
          %s160 = scalar_lea.vmem %s0, %s159
          %s161 = sadd.s32 %s19, %s20
          %p162 = scmp.lt.s32.totalorder %s161, 0
          %s163 = scalar_select %p162, %s161, 0
          %s164 = smul.u32 2, %s163
        $region28: #{tpu_custom_call.1} parent=23 // pred_fallthru
          _
      $region24: #{tpu_custom_call.1} parent=5 // pred_fallthru
        _
      %p165 = scmp.le.s32.totalorder 1, %s12
      %p166 = scmp.lt.s32.totalorder %s12, 3
      %p167 = pnand %p165, %p166
      %p168 = pneg %p167
      // Predicated region
      $region29: #{tpu_custom_call.1} parent=5 // pred_check
        _
      $region30: #{tpu_custom_call.1} parent=5 // pred_check_branch
        %170 = sbr.rel (%p167) target = $region32
      $region31: #{tpu_custom_call.1} parent=5 // pred_region
        %s171 = ssub.s32 %s12, 1
        %s172 = sadd.s32 %s21, %s22
        %p173 = scmp.lt.s32.totalorder %s172, 0
        %s174 = scalar_select %p173, %s172, 0
        %s175 = smul.u32 2, %s174
        %p176 = scmp.lt.s32.totalorder %s175, 1
        %s177 = scalar_select %p176, %s175, 1
        %s178 = smul.addr %s177, 2
        %s179 = smul.addr %s178, 8
        %s180 = scalar_lea.vmem %s0, %s179
        %p181 = pneg %p56
        %p182 = pneg %p53
        %p183 = pneg %p77
        %p184 = pneg %p74
        %p185 = pneg %p98
        %p186 = pneg %p95
        %p187 = pneg %p124
        %p188 = pneg %p121
        %s189 = sand.u32 %s111, 1
        %s190 = scalar_lea.sflag [#allocation3], %s189
        %s191 = sand.u32 %s111, 1
        %s192 = scalar_lea.vmem [#allocation2], %s191
        %s193 = sadd.s32 %s21, %s22
        %p194 = scmp.lt.s32.totalorder %s193, 0
        %s195 = scalar_select %p194, %s193, 0
        %s196 = smul.u32 2, %s195
        %p197 = scmp.lt.s32.totalorder %s196, 1
        %s198 = scalar_select %p197, %s196, 1
        %s199 = smul.addr %s198, 2
        %s200 = smul.addr %s199, 8
        %s201 = scalar_lea.vmem %s0, %s200
        %s202 = sadd.s32 %s21, %s22
        %p203 = scmp.lt.s32.totalorder %s202, 0
        %s204 = scalar_select %p203, %s202, 0
        %s205 = smul.u32 2, %s204
        %p206 = scmp.eq.s32.totalorder %s22, 0
        // Predicated region
        $region33: #{tpu_custom_call.1} parent=31 // pred_check
          %p207 = pneg %p206
        $region34: #{tpu_custom_call.1} parent=31 // pred_check_branch
          %209 = sbr.rel (%p207) target = $region36
        $region35: #{tpu_custom_call.1} parent=31 // pred_region
          %210 = vst [vmem:[%s192] sm:$0x1] 0.0
        $region36: #{tpu_custom_call.1} parent=31 // pred_fallthru
          _
        %s211 = sadd.s32 %s21, %s22
        %p212 = scmp.lt.s32.totalorder %s211, 1
        // Predicated region
        $region37: #{tpu_custom_call.1} parent=31 // pred_check
          %p213 = pneg %p212
        $region38: #{tpu_custom_call.1} parent=31 // pred_check_branch
          %215 = sbr.rel (%p213) target = $region40
        $region39: #{tpu_custom_call.1} parent=31 // pred_region
          %v216 = vld [vmem:[%s2] sm:$0x1]
          %v217 = vld [vmem:[%s1] sm:$0xf]
          %s218 = scalar_lea.vmem %s1, 4
          %v219 = vld [vmem:[%s218] sm:$0xf]
          %s220 = scalar_lea.vmem %s1, 8
          %v221 = vld [vmem:[%s220] sm:$0xf]
          %v222 = vld [vmem:[%s201] sm:$0xff]
          %v223 = vld [vmem:[%s201 + $0x8] sm:$0x3]
          %vm226 = vcmask 1046528
          %v227 = vrot.slane %v222, 1
          %v228 = vrot.slane %v223, 1
          %v229 = vsel %vm226, %v227, %v228
          %vm230 = vcmask 31744
          %v231 = vsel %vm230, %v229, 0
          %vm233 = vcmask 1043456
          %v235 = vsel %vm233, %v219, 0
          %237 = vmatprep.subr.mxu0 0.0
          %238 = vmatpush1.msra.mxu0 %v235
          %239 = vmatprep.subr.mxu0 0.0
          %240 = vmatpush1.msra.mxu0 0.0
          %241 = vmatprep.subr.mxu0 0.0
          %242 = vmatpush1.msra.mxu0 0.0
          %243 = vmatprep.subr.mxu0 0.0
          %244 = vmatpush1.msra.mxu0 0.0
          %245 = vmatprep.subr.mxu0 0.0
          %246 = vmatpush1.msra.mxu0 0.0
          %247 = vmatprep.subr.mxu0 0.0
          %248 = vmatpush1.msra.mxu0 0.0
          %249 = vmatprep.subr.mxu0 0.0
          %250 = vmatpush1.msra.mxu0 0.0
          %251 = vmatprep.subr.mxu0 0.0
          %252 = vmatpush1.msra.mxu0 0.0
          %253 = vmatprep.subr.mxu0 0.0
          %254 = vmatpush1.msra.mxu0 0.0
          %255 = vmatprep.subr.mxu0 0.0
          %256 = vmatpush1.msra.mxu0 0.0
          %257 = vmatprep.subr.mxu0 0.0
          %258 = vmatpush1.msra.mxu0 0.0
          %259 = vmatprep.subr.mxu0 0.0
          %260 = vmatpush1.msra.mxu0 0.0
          %261 = vmatprep.subr.mxu0 0.0
          %262 = vmatpush1.msra.mxu0 0.0
          %263 = vmatprep.subr.mxu0 0.0
          %264 = vmatpush1.msra.mxu0 0.0
          %265 = vmatprep.subr.mxu0 0.0
          %266 = vmatpush1.msra.mxu0 0.0
          %267 = vmatprep.subr.mxu0 0.0
          %268 = vmatpush1.msra.mxu0 0.0
          %269 = vmatprep.subr.mxu0 0.0
          %270 = vmatpush1.msra.mxu0 0.0
          %271 = vmatprep.subr.mxu0 0.0
          %272 = vmatpush1.msra.mxu0 0.0
          %273 = vmatprep.subr.mxu0 0.0
          %274 = vmatpush1.msra.mxu0 0.0
          %275 = vmatprep.subr.mxu0 0.0
          %276 = vmatpush1.msra.mxu0 0.0
          %277 = vmatprep.subr.mxu0 0.0
          %278 = vmatpush1.msra.mxu0 0.0
          %279 = vmatprep.subr.mxu0 0.0
          %280 = vmatpush1.msra.mxu0 0.0
          %281 = vmatprep.subr.mxu0 0.0
          %282 = vmatpush1.msra.mxu0 0.0
          %283 = vmatprep.subr.mxu0 0.0
          %284 = vmatpush1.msra.mxu0 0.0
          %285 = vmatprep.subr.mxu0 0.0
          %286 = vmatpush1.msra.mxu0 0.0
          %287 = vmatprep.subr.mxu0 0.0
          %288 = vmatpush1.msra.mxu0 0.0
          %289 = vmatprep.subr.mxu0 0.0
          %290 = vmatpush1.msra.mxu0 0.0
          %291 = vmatprep.subr.mxu0 0.0
          %292 = vmatpush1.msra.mxu0 0.0
          %293 = vmatprep.subr.mxu0 0.0
          %294 = vmatpush1.msra.mxu0 0.0
          %295 = vmatprep.subr.mxu0 0.0
          %296 = vmatpush1.msra.mxu0 0.0
          %297 = vmatprep.subr.mxu0 0.0
          %298 = vmatpush1.msra.mxu0 0.0
          %299 = vmatprep.subr.mxu0 0.0
          %300 = vmatpush1.msra.mxu0 0.0
          %301 = vmatprep.mubr.f32.mxu0 0.0
          %302 = vmatmul.mubr.f32.gmra.mrb[0].mxu0 %v231
          %v303 = vpop.f32.mrb[0].mxu0
          %v304 = vadd.f32 0.0, %v303
          %v305 = vpop.f32.mrb[0].mxu0
          %306 = vdwg.mxu0
          %v307 = vsel %vm230, %v222, 0
          %v310 = vsel %vm233, %v217, 0
          %312 = vmatprep.subr.mxu0 0.0
          %313 = vmatpush1.msra.mxu0 %v310
          %314 = vmatprep.subr.mxu0 0.0
          %315 = vmatpush1.msra.mxu0 0.0
          %316 = vmatprep.subr.mxu0 0.0
          %317 = vmatpush1.msra.mxu0 0.0
          %318 = vmatprep.subr.mxu0 0.0
          %319 = vmatpush1.msra.mxu0 0.0
          %320 = vmatprep.subr.mxu0 0.0
          %321 = vmatpush1.msra.mxu0 0.0
          %322 = vmatprep.subr.mxu0 0.0
          %323 = vmatpush1.msra.mxu0 0.0
          %324 = vmatprep.subr.mxu0 0.0
          %325 = vmatpush1.msra.mxu0 0.0
          %326 = vmatprep.subr.mxu0 0.0
          %327 = vmatpush1.msra.mxu0 0.0
          %328 = vmatprep.subr.mxu0 0.0
          %329 = vmatpush1.msra.mxu0 0.0
          %330 = vmatprep.subr.mxu0 0.0
          %331 = vmatpush1.msra.mxu0 0.0
          %332 = vmatprep.subr.mxu0 0.0
          %333 = vmatpush1.msra.mxu0 0.0
          %334 = vmatprep.subr.mxu0 0.0
          %335 = vmatpush1.msra.mxu0 0.0
          %336 = vmatprep.subr.mxu0 0.0
          %337 = vmatpush1.msra.mxu0 0.0
          %338 = vmatprep.subr.mxu0 0.0
          %339 = vmatpush1.msra.mxu0 0.0
          %340 = vmatprep.subr.mxu0 0.0
          %341 = vmatpush1.msra.mxu0 0.0
          %342 = vmatprep.subr.mxu0 0.0
          %343 = vmatpush1.msra.mxu0 0.0
          %344 = vmatprep.subr.mxu0 0.0
          %345 = vmatpush1.msra.mxu0 0.0
          %346 = vmatprep.subr.mxu0 0.0
          %347 = vmatpush1.msra.mxu0 0.0
          %348 = vmatprep.subr.mxu0 0.0
          %349 = vmatpush1.msra.mxu0 0.0
          %350 = vmatprep.subr.mxu0 0.0
          %351 = vmatpush1.msra.mxu0 0.0
          %352 = vmatprep.subr.mxu0 0.0
          %353 = vmatpush1.msra.mxu0 0.0
          %354 = vmatprep.subr.mxu0 0.0
          %355 = vmatpush1.msra.mxu0 0.0
          %356 = vmatprep.subr.mxu0 0.0
          %357 = vmatpush1.msra.mxu0 0.0
          %358 = vmatprep.subr.mxu0 0.0
          %359 = vmatpush1.msra.mxu0 0.0
          %360 = vmatprep.subr.mxu0 0.0
          %361 = vmatpush1.msra.mxu0 0.0
          %362 = vmatprep.subr.mxu0 0.0
          %363 = vmatpush1.msra.mxu0 0.0
          %364 = vmatprep.subr.mxu0 0.0
          %365 = vmatpush1.msra.mxu0 0.0
          %366 = vmatprep.subr.mxu0 0.0
          %367 = vmatpush1.msra.mxu0 0.0
          %368 = vmatprep.subr.mxu0 0.0
          %369 = vmatpush1.msra.mxu0 0.0
          %370 = vmatprep.subr.mxu0 0.0
          %371 = vmatpush1.msra.mxu0 0.0
          %372 = vmatprep.subr.mxu0 0.0
          %373 = vmatpush1.msra.mxu0 0.0
          %374 = vmatprep.subr.mxu0 0.0
          %375 = vmatpush1.msra.mxu0 0.0
          %376 = vmatprep.mubr.f32.mxu0 0.0
          %377 = vmatmul.mubr.f32.gmra.mrb[0].mxu0 %v307
          %v378 = vpop.f32.mrb[0].mxu0
          %v379 = vadd.f32 %v304, %v378
          %v380 = vpop.f32.mrb[0].mxu0
          %381 = vdwg.mxu0
          %vm382 = vcmask 1045504
          %v383 = vrot.slane %v222, 2
          %v384 = vrot.slane %v223, 2
          %v385 = vsel %vm382, %v383, %v384
          %v386 = vsel %vm230, %v385, 0
          %v389 = vsel %vm233, %v221, 0
          %391 = vmatprep.subr.mxu0 0.0
          %392 = vmatpush1.msra.mxu0 %v389
          %393 = vmatprep.subr.mxu0 0.0
          %394 = vmatpush1.msra.mxu0 0.0
          %395 = vmatprep.subr.mxu0 0.0
          %396 = vmatpush1.msra.mxu0 0.0
          %397 = vmatprep.subr.mxu0 0.0
          %398 = vmatpush1.msra.mxu0 0.0
          %399 = vmatprep.subr.mxu0 0.0
          %400 = vmatpush1.msra.mxu0 0.0
          %401 = vmatprep.subr.mxu0 0.0
          %402 = vmatpush1.msra.mxu0 0.0
          %403 = vmatprep.subr.mxu0 0.0
          %404 = vmatpush1.msra.mxu0 0.0
          %405 = vmatprep.subr.mxu0 0.0
          %406 = vmatpush1.msra.mxu0 0.0
          %407 = vmatprep.subr.mxu0 0.0
          %408 = vmatpush1.msra.mxu0 0.0
          %409 = vmatprep.subr.mxu0 0.0
          %410 = vmatpush1.msra.mxu0 0.0
          %411 = vmatprep.subr.mxu0 0.0
          %412 = vmatpush1.msra.mxu0 0.0
          %413 = vmatprep.subr.mxu0 0.0
          %414 = vmatpush1.msra.mxu0 0.0
          %415 = vmatprep.subr.mxu0 0.0
          %416 = vmatpush1.msra.mxu0 0.0
          %417 = vmatprep.subr.mxu0 0.0
          %418 = vmatpush1.msra.mxu0 0.0
          %419 = vmatprep.subr.mxu0 0.0
          %420 = vmatpush1.msra.mxu0 0.0
          %421 = vmatprep.subr.mxu0 0.0
          %422 = vmatpush1.msra.mxu0 0.0
          %423 = vmatprep.subr.mxu0 0.0
          %424 = vmatpush1.msra.mxu0 0.0
          %425 = vmatprep.subr.mxu0 0.0
          %426 = vmatpush1.msra.mxu0 0.0
          %427 = vmatprep.subr.mxu0 0.0
          %428 = vmatpush1.msra.mxu0 0.0
          %429 = vmatprep.subr.mxu0 0.0
          %430 = vmatpush1.msra.mxu0 0.0
          %431 = vmatprep.subr.mxu0 0.0
          %432 = vmatpush1.msra.mxu0 0.0
          %433 = vmatprep.subr.mxu0 0.0
          %434 = vmatpush1.msra.mxu0 0.0
          %435 = vmatprep.subr.mxu0 0.0
          %436 = vmatpush1.msra.mxu0 0.0
          %437 = vmatprep.subr.mxu0 0.0
          %438 = vmatpush1.msra.mxu0 0.0
          %439 = vmatprep.subr.mxu0 0.0
          %440 = vmatpush1.msra.mxu0 0.0
          %441 = vmatprep.subr.mxu0 0.0
          %442 = vmatpush1.msra.mxu0 0.0
          %443 = vmatprep.subr.mxu0 0.0
          %444 = vmatpush1.msra.mxu0 0.0
          %445 = vmatprep.subr.mxu0 0.0
          %446 = vmatpush1.msra.mxu0 0.0
          %447 = vmatprep.subr.mxu0 0.0
          %448 = vmatpush1.msra.mxu0 0.0
          %449 = vmatprep.subr.mxu0 0.0
          %450 = vmatpush1.msra.mxu0 0.0
          %451 = vmatprep.subr.mxu0 0.0
          %452 = vmatpush1.msra.mxu0 0.0
          %453 = vmatprep.subr.mxu0 0.0
          %454 = vmatpush1.msra.mxu0 0.0
          %455 = vmatprep.mubr.f32.mxu0 0.0
          %456 = vmatmul.mubr.f32.gmra.mrb[0].mxu0 %v386
          %v457 = vpop.f32.mrb[0].mxu0
          %v458 = vadd.f32 0.0, %v457
          %v459 = vpop.f32.mrb[0].mxu0
          %460 = vdwg.mxu0
          %v461 = vadd.f32 %v379, %v458
          %v463 = vlaneseq
          %v464 = vshrl.u32 %v463, 7
          %v465 = vsub.s32 0, %v464
          %v466 = vrot.slane %v216, %v465
          %v468 = vsub.f32 %v461, %v466
          %v469 = vmul.f32 %v468, %v468
          %s470 = scalar_lea.vmem %s201, 16
          %v471 = vld [vmem:[%s470] sm:$0xff]
          %v472 = vld [vmem:[%s470 + $0x8] sm:$0x3]
          %v475 = vrot.slane %v471, 1
          %v476 = vrot.slane %v472, 1
          %v477 = vsel %vm226, %v475, %v476
          %v478 = vsel %vm230, %v477, 0
          %480 = vmatprep.subr.mxu0 0.0
          %481 = vmatpush1.msra.mxu0 %v235
          %482 = vmatprep.subr.mxu0 0.0
          %483 = vmatpush1.msra.mxu0 0.0
          %484 = vmatprep.subr.mxu0 0.0
          %485 = vmatpush1.msra.mxu0 0.0
          %486 = vmatprep.subr.mxu0 0.0
          %487 = vmatpush1.msra.mxu0 0.0
          %488 = vmatprep.subr.mxu0 0.0
          %489 = vmatpush1.msra.mxu0 0.0
          %490 = vmatprep.subr.mxu0 0.0
          %491 = vmatpush1.msra.mxu0 0.0
          %492 = vmatprep.subr.mxu0 0.0
          %493 = vmatpush1.msra.mxu0 0.0
          %494 = vmatprep.subr.mxu0 0.0
          %495 = vmatpush1.msra.mxu0 0.0
          %496 = vmatprep.subr.mxu0 0.0
          %497 = vmatpush1.msra.mxu0 0.0
          %498 = vmatprep.subr.mxu0 0.0
          %499 = vmatpush1.msra.mxu0 0.0
          %500 = vmatprep.subr.mxu0 0.0
          %501 = vmatpush1.msra.mxu0 0.0
          %502 = vmatprep.subr.mxu0 0.0
          %503 = vmatpush1.msra.mxu0 0.0
          %504 = vmatprep.subr.mxu0 0.0
          %505 = vmatpush1.msra.mxu0 0.0
          %506 = vmatprep.subr.mxu0 0.0
          %507 = vmatpush1.msra.mxu0 0.0
          %508 = vmatprep.subr.mxu0 0.0
          %509 = vmatpush1.msra.mxu0 0.0
          %510 = vmatprep.subr.mxu0 0.0
          %511 = vmatpush1.msra.mxu0 0.0
          %512 = vmatprep.subr.mxu0 0.0
          %513 = vmatpush1.msra.mxu0 0.0
          %514 = vmatprep.subr.mxu0 0.0
          %515 = vmatpush1.msra.mxu0 0.0
          %516 = vmatprep.subr.mxu0 0.0
          %517 = vmatpush1.msra.mxu0 0.0
          %518 = vmatprep.subr.mxu0 0.0
          %519 = vmatpush1.msra.mxu0 0.0
          %520 = vmatprep.subr.mxu0 0.0
          %521 = vmatpush1.msra.mxu0 0.0
          %522 = vmatprep.subr.mxu0 0.0
          %523 = vmatpush1.msra.mxu0 0.0
          %524 = vmatprep.subr.mxu0 0.0
          %525 = vmatpush1.msra.mxu0 0.0
          %526 = vmatprep.subr.mxu0 0.0
          %527 = vmatpush1.msra.mxu0 0.0
          %528 = vmatprep.subr.mxu0 0.0
          %529 = vmatpush1.msra.mxu0 0.0
          %530 = vmatprep.subr.mxu0 0.0
          %531 = vmatpush1.msra.mxu0 0.0
          %532 = vmatprep.subr.mxu0 0.0
          %533 = vmatpush1.msra.mxu0 0.0
          %534 = vmatprep.subr.mxu0 0.0
          %535 = vmatpush1.msra.mxu0 0.0
          %536 = vmatprep.subr.mxu0 0.0
          %537 = vmatpush1.msra.mxu0 0.0
          %538 = vmatprep.subr.mxu0 0.0
          %539 = vmatpush1.msra.mxu0 0.0
          %540 = vmatprep.subr.mxu0 0.0
          %541 = vmatpush1.msra.mxu0 0.0
          %542 = vmatprep.subr.mxu0 0.0
          %543 = vmatpush1.msra.mxu0 0.0
          %544 = vmatprep.mubr.f32.mxu0 0.0
          %545 = vmatmul.mubr.f32.gmra.mrb[0].mxu0 %v478
          %v546 = vpop.f32.mrb[0].mxu0
          %v547 = vadd.f32 0.0, %v546
          %v548 = vpop.f32.mrb[0].mxu0
          %549 = vdwg.mxu0
          %v550 = vsel %vm230, %v471, 0
          %552 = vmatprep.subr.mxu0 0.0
          %553 = vmatpush1.msra.mxu0 %v310
          %554 = vmatprep.subr.mxu0 0.0
          %555 = vmatpush1.msra.mxu0 0.0
          %556 = vmatprep.subr.mxu0 0.0
          %557 = vmatpush1.msra.mxu0 0.0
          %558 = vmatprep.subr.mxu0 0.0
          %559 = vmatpush1.msra.mxu0 0.0
          %560 = vmatprep.subr.mxu0 0.0
          %561 = vmatpush1.msra.mxu0 0.0
          %562 = vmatprep.subr.mxu0 0.0
          %563 = vmatpush1.msra.mxu0 0.0
          %564 = vmatprep.subr.mxu0 0.0
          %565 = vmatpush1.msra.mxu0 0.0
          %566 = vmatprep.subr.mxu0 0.0
          %567 = vmatpush1.msra.mxu0 0.0
          %568 = vmatprep.subr.mxu0 0.0
          %569 = vmatpush1.msra.mxu0 0.0
          %570 = vmatprep.subr.mxu0 0.0
          %571 = vmatpush1.msra.mxu0 0.0
          %572 = vmatprep.subr.mxu0 0.0
          %573 = vmatpush1.msra.mxu0 0.0
          %574 = vmatprep.subr.mxu0 0.0
          %575 = vmatpush1.msra.mxu0 0.0
          %576 = vmatprep.subr.mxu0 0.0
          %577 = vmatpush1.msra.mxu0 0.0
          %578 = vmatprep.subr.mxu0 0.0
          %579 = vmatpush1.msra.mxu0 0.0
          %580 = vmatprep.subr.mxu0 0.0
          %581 = vmatpush1.msra.mxu0 0.0
          %582 = vmatprep.subr.mxu0 0.0
          %583 = vmatpush1.msra.mxu0 0.0
          %584 = vmatprep.subr.mxu0 0.0
          %585 = vmatpush1.msra.mxu0 0.0
          %586 = vmatprep.subr.mxu0 0.0
          %587 = vmatpush1.msra.mxu0 0.0
          %588 = vmatprep.subr.mxu0 0.0
          %589 = vmatpush1.msra.mxu0 0.0
          %590 = vmatprep.subr.mxu0 0.0
          %591 = vmatpush1.msra.mxu0 0.0
          %592 = vmatprep.subr.mxu0 0.0
          %593 = vmatpush1.msra.mxu0 0.0
          %594 = vmatprep.subr.mxu0 0.0
          %595 = vmatpush1.msra.mxu0 0.0
          %596 = vmatprep.subr.mxu0 0.0
          %597 = vmatpush1.msra.mxu0 0.0
          %598 = vmatprep.subr.mxu0 0.0
          %599 = vmatpush1.msra.mxu0 0.0
          %600 = vmatprep.subr.mxu0 0.0
          %601 = vmatpush1.msra.mxu0 0.0
          %602 = vmatprep.subr.mxu0 0.0
          %603 = vmatpush1.msra.mxu0 0.0
          %604 = vmatprep.subr.mxu0 0.0
          %605 = vmatpush1.msra.mxu0 0.0
          %606 = vmatprep.subr.mxu0 0.0
          %607 = vmatpush1.msra.mxu0 0.0
          %608 = vmatprep.subr.mxu0 0.0
          %609 = vmatpush1.msra.mxu0 0.0
          %610 = vmatprep.subr.mxu0 0.0
          %611 = vmatpush1.msra.mxu0 0.0
          %612 = vmatprep.subr.mxu0 0.0
          %613 = vmatpush1.msra.mxu0 0.0
          %614 = vmatprep.subr.mxu0 0.0
          %615 = vmatpush1.msra.mxu0 0.0
          %616 = vmatprep.mubr.f32.mxu0 0.0
          %617 = vmatmul.mubr.f32.gmra.mrb[0].mxu0 %v550
          %v618 = vpop.f32.mrb[0].mxu0
          %v619 = vadd.f32 %v547, %v618
          %v620 = vpop.f32.mrb[0].mxu0
          %621 = vdwg.mxu0
          %v622 = vrot.slane %v471, 2
          %v623 = vrot.slane %v472, 2
          %v624 = vsel %vm382, %v622, %v623
          %v625 = vsel %vm230, %v624, 0
          %627 = vmatprep.subr.mxu0 0.0
          %628 = vmatpush1.msra.mxu0 %v389
          %629 = vmatprep.subr.mxu0 0.0
          %630 = vmatpush1.msra.mxu0 0.0
          %631 = vmatprep.subr.mxu0 0.0
          %632 = vmatpush1.msra.mxu0 0.0
          %633 = vmatprep.subr.mxu0 0.0
          %634 = vmatpush1.msra.mxu0 0.0
          %635 = vmatprep.subr.mxu0 0.0
          %636 = vmatpush1.msra.mxu0 0.0
          %637 = vmatprep.subr.mxu0 0.0
          %638 = vmatpush1.msra.mxu0 0.0
          %639 = vmatprep.subr.mxu0 0.0
          %640 = vmatpush1.msra.mxu0 0.0
          %641 = vmatprep.subr.mxu0 0.0
          %642 = vmatpush1.msra.mxu0 0.0
          %643 = vmatprep.subr.mxu0 0.0
          %644 = vmatpush1.msra.mxu0 0.0
          %645 = vmatprep.subr.mxu0 0.0
          %646 = vmatpush1.msra.mxu0 0.0
          %647 = vmatprep.subr.mxu0 0.0
          %648 = vmatpush1.msra.mxu0 0.0
          %649 = vmatprep.subr.mxu0 0.0
          %650 = vmatpush1.msra.mxu0 0.0
          %651 = vmatprep.subr.mxu0 0.0
          %652 = vmatpush1.msra.mxu0 0.0
          %653 = vmatprep.subr.mxu0 0.0
          %654 = vmatpush1.msra.mxu0 0.0
          %655 = vmatprep.subr.mxu0 0.0
          %656 = vmatpush1.msra.mxu0 0.0
          %657 = vmatprep.subr.mxu0 0.0
          %658 = vmatpush1.msra.mxu0 0.0
          %659 = vmatprep.subr.mxu0 0.0
          %660 = vmatpush1.msra.mxu0 0.0
          %661 = vmatprep.subr.mxu0 0.0
          %662 = vmatpush1.msra.mxu0 0.0
          %663 = vmatprep.subr.mxu0 0.0
          %664 = vmatpush1.msra.mxu0 0.0
          %665 = vmatprep.subr.mxu0 0.0
          %666 = vmatpush1.msra.mxu0 0.0
          %667 = vmatprep.subr.mxu0 0.0
          %668 = vmatpush1.msra.mxu0 0.0
          %669 = vmatprep.subr.mxu0 0.0
          %670 = vmatpush1.msra.mxu0 0.0
          %671 = vmatprep.subr.mxu0 0.0
          %672 = vmatpush1.msra.mxu0 0.0
          %673 = vmatprep.subr.mxu0 0.0
          %674 = vmatpush1.msra.mxu0 0.0
          %675 = vmatprep.subr.mxu0 0.0
          %676 = vmatpush1.msra.mxu0 0.0
          %677 = vmatprep.subr.mxu0 0.0
          %678 = vmatpush1.msra.mxu0 0.0
          %679 = vmatprep.subr.mxu0 0.0
          %680 = vmatpush1.msra.mxu0 0.0
          %681 = vmatprep.subr.mxu0 0.0
          %682 = vmatpush1.msra.mxu0 0.0
          %683 = vmatprep.subr.mxu0 0.0
          %684 = vmatpush1.msra.mxu0 0.0
          %685 = vmatprep.subr.mxu0 0.0
          %686 = vmatpush1.msra.mxu0 0.0
          %687 = vmatprep.subr.mxu0 0.0
          %688 = vmatpush1.msra.mxu0 0.0
          %689 = vmatprep.subr.mxu0 0.0
          %690 = vmatpush1.msra.mxu0 0.0
          %691 = vmatprep.mubr.f32.mxu0 0.0
          %692 = vmatmul.mubr.f32.gmra.mrb[0].mxu0 %v625
          %v693 = vpop.f32.mrb[0].mxu0
          %v694 = vadd.f32 0.0, %v693
          %v695 = vpop.f32.mrb[0].mxu0
          %696 = vdwg.mxu0
          %v697 = vadd.f32 %v619, %v694
          %v698 = vsub.f32 %v697, %v466
          %v699 = vmul.f32 %v698, %v698
          %v700 = vadd.f32 %v469, %v699
          %v701 = vld [vmem:[%s192] sm:$0x1]
          %vm702 = vcmask 64512
          %v704 = vsel %vm702, 1.0, 0
          %706 = vmatprep.subr.mxu0 0.0
          %707 = vmatpush1.msra.mxu0 %v700
          %708 = vmatprep.subr.mxu0 0.0
          %709 = vmatpush1.msra.mxu0 0.0
          %710 = vmatprep.subr.mxu0 0.0
          %711 = vmatpush1.msra.mxu0 0.0
          %712 = vmatprep.subr.mxu0 0.0
          %713 = vmatpush1.msra.mxu0 0.0
          %714 = vmatprep.subr.mxu0 0.0
          %715 = vmatpush1.msra.mxu0 0.0
          %716 = vmatprep.subr.mxu0 0.0
          %717 = vmatpush1.msra.mxu0 0.0
          %718 = vmatprep.subr.mxu0 0.0
          %719 = vmatpush1.msra.mxu0 0.0
          %720 = vmatprep.subr.mxu0 0.0
          %721 = vmatpush1.msra.mxu0 0.0
          %722 = vmatprep.subr.mxu0 0.0
          %723 = vmatpush1.msra.mxu0 0.0
          %724 = vmatprep.subr.mxu0 0.0
          %725 = vmatpush1.msra.mxu0 0.0
          %726 = vmatprep.subr.mxu0 0.0
          %727 = vmatpush1.msra.mxu0 0.0
          %728 = vmatprep.subr.mxu0 0.0
          %729 = vmatpush1.msra.mxu0 0.0
          %730 = vmatprep.subr.mxu0 0.0
          %731 = vmatpush1.msra.mxu0 0.0
          %732 = vmatprep.subr.mxu0 0.0
          %733 = vmatpush1.msra.mxu0 0.0
          %734 = vmatprep.subr.mxu0 0.0
          %735 = vmatpush1.msra.mxu0 0.0
          %736 = vmatprep.subr.mxu0 0.0
          %737 = vmatpush1.msra.mxu0 0.0
          %738 = vmatprep.subr.mxu0 0.0
          %739 = vmatpush1.msra.mxu0 0.0
          %740 = vmatprep.subr.mxu0 0.0
          %741 = vmatpush1.msra.mxu0 0.0
          %742 = vmatprep.subr.mxu0 0.0
          %743 = vmatpush1.msra.mxu0 0.0
          %744 = vmatprep.subr.mxu0 0.0
          %745 = vmatpush1.msra.mxu0 0.0
          %746 = vmatprep.subr.mxu0 0.0
          %747 = vmatpush1.msra.mxu0 0.0
          %748 = vmatprep.subr.mxu0 0.0
          %749 = vmatpush1.msra.mxu0 0.0
          %750 = vmatprep.subr.mxu0 0.0
          %751 = vmatpush1.msra.mxu0 0.0
          %752 = vmatprep.subr.mxu0 0.0
          %753 = vmatpush1.msra.mxu0 0.0
          %754 = vmatprep.subr.mxu0 0.0
          %755 = vmatpush1.msra.mxu0 0.0
          %756 = vmatprep.subr.mxu0 0.0
          %757 = vmatpush1.msra.mxu0 0.0
          %758 = vmatprep.subr.mxu0 0.0
          %759 = vmatpush1.msra.mxu0 0.0
          %760 = vmatprep.subr.mxu0 0.0
          %761 = vmatpush1.msra.mxu0 0.0
          %762 = vmatprep.subr.mxu0 0.0
          %763 = vmatpush1.msra.mxu0 0.0
          %764 = vmatprep.subr.mxu0 0.0
          %765 = vmatpush1.msra.mxu0 0.0
          %766 = vmatprep.subr.mxu0 0.0
          %767 = vmatpush1.msra.mxu0 0.0
          %768 = vmatprep.subr.mxu0 0.0
          %769 = vmatpush1.msra.mxu0 0.0
          %770 = vmatprep.mubr.f32.mxu0 0.0
          %771 = vmatmul.mubr.f32.gmra.mrb[0].mxu0 %v704
          %v772 = vpop.f32.mrb[0].mxu0
          %v773 = vadd.f32 0.0, %v772
          %v774 = vpop.f32.mrb[0].mxu0
          %775 = vdwg.mxu0
          %v776 = vadd.f32 %v701, %v773
          %777 = vst [vmem:[%s192] sm:$0x1] %v776
        $region40: #{tpu_custom_call.1} parent=31 // pred_fallthru
          _
        %s778 = sand.u32 %s111, 1
        %s779 = scalar_lea.sflag [#allocation3], %s778
        %s780 = sand.u32 %s111, 1
        %s781 = scalar_lea.vmem [#allocation2], %s780
        // Predicated region
        $region41: #{tpu_custom_call.1} parent=31 // pred_check
          %p782 = pneg %p121
        $region42: #{tpu_custom_call.1} parent=31 // pred_check_branch
          %784 = sbr.rel (%p782) target = $region44
        $region43: #{tpu_custom_call.1} parent=31 // pred_region
          %s786 = ssub.s32 16, 16
          %787 = vsyncadd %s779, %s786
          %s788 = smul.addr %s21, 16
          %s789 = scalar_lea.hbm %s3, %s788
          %s791 = sshll.u32 %s781, 4
          %s792 = int_to_ptr.vmem [resolvable:$true] %s791
          %794 = dma.vmem_to_hbm [thread:$0]  %s792, 16, %s789, %s779
        $region44: #{tpu_custom_call.1} parent=31 // pred_fallthru
          _
      $region32: #{tpu_custom_call.1} parent=5 // pred_fallthru
        _
      %p795 = scmp.le.s32.totalorder 2, %s12
      // Predicated region
      $region45: #{tpu_custom_call.1} parent=5 // pred_check
        %p796 = pneg %p795
      $region46: #{tpu_custom_call.1} parent=5 // pred_check_branch
        %798 = sbr.rel (%p796) target = $region48
      $region47: #{tpu_custom_call.1} parent=5 // pred_region
        %s799 = ssub.s32 %s12, 2
        // Predicated region
        $region49: #{tpu_custom_call.1} parent=47 // pred_check
          %p800 = pneg %p127
        $region50: #{tpu_custom_call.1} parent=47 // pred_check_branch
          %802 = sbr.rel (%p800) target = $region52
        $region51: #{tpu_custom_call.1} parent=47 // pred_region
          %s803 = sand.u32 %s112, 1
          %s804 = scalar_lea.sflag [#allocation3], %s803
          %s805 = sand.u32 %s112, 1
          %s806 = scalar_lea.vmem [#allocation2], %s805
          %807 = dma.done %s804, 16
        $region52: #{tpu_custom_call.1} parent=47 // pred_fallthru
          _
      $region48: #{tpu_custom_call.1} parent=5 // pred_fallthru
        _
    $region6: #{tpu_custom_call.1} parent=1 // loop_footer
      %s16 = sadd.s32 1, %s12
    $region7: #{tpu_custom_call.1} parent=1 // loop_footer_branch
      %11 = sbr.rel target = $region3
    $region8: #{tpu_custom_call.1} parent=1 // loop_exit
      _
    %808 = vsyncpa [#allocation3], 1
    %s809 = scalar_lea.sflag [#allocation3], 1
    %810 = vsyncpa %s809, 1

</llo_original>
